<compile_context>
chip_gen: v7x
topology: tpu7x:2x2x1
jax: 0.10.0
libtpu: 0.0.40
codegen_flags: <defaults>
</compile_context>

<pallas_src>
import jax
import jax.numpy as jnp
from jax.experimental import pallas as pl
from jax.experimental.pallas import tpu as pltpu


# ---------------------------------------------------------------------------
# kernel
# ---------------------------------------------------------------------------
def _make_unpool_kernel(kh, W_out):
    """Kernel over a block of pooled rows.

    x_ref   : (R, Wp)        pooled values (input dtype)
    off_ref : (R, Wp) int8   window-offset id in [0, kh*kw), -1 = drop
    rep_ref : (Wp, W_out)    bf16 constant 0/1 lane-repeat matrix,
                             rep[j, l] = (l // kw == j)        (resident)
    tgt_ref : (kh, 1, W_out) f32 constants, tgt[di, 0, l] = di*kw + l % kw
    o_ref   : (R, kh*W_out)  output rows in final NCHW layout
    """

    def kernel(x_ref, off_ref, rep_ref, tgt_ref, o_ref):
        rep = rep_ref[...]                                     # (Wp, W_out) bf16

        # Lane-expand the window-offset ids: off_exp[r, l] == off[r, l // kw].
        # Values are tiny integers -> exact in bf16; bf16 matmul (no int
        # matmul -> v7x-safe), f32 accumulation -> exact small floats.
        off_b = (off_ref[...].astype(jnp.int32)
                 .astype(jnp.float32).astype(jnp.bfloat16))
        off_exp = jnp.dot(off_b, rep, preferred_element_type=jnp.float32)

        # Lane-expand the pooled values (bit exact).
        x = x_ref[...]
        if x.dtype == jnp.bfloat16:
            x_exp = jnp.dot(x, rep, preferred_element_type=jnp.float32)
        else:
            # Exact 3-way bf16 split of f32: hi + mid + lo == x exactly, and
            # each bf16 piece times the 0/1 matrix is exact, so the sum
            # reconstructs x bit-exactly (explicit highest-precision path).
            xf = x.astype(jnp.float32)
            hi = xf.astype(jnp.bfloat16)
            r1 = xf - hi.astype(jnp.float32)
            mid = r1.astype(jnp.bfloat16)
            lo = (r1 - mid.astype(jnp.float32)).astype(jnp.bfloat16)
            x_exp = (jnp.dot(hi, rep, preferred_element_type=jnp.float32)
                     + jnp.dot(mid, rep, preferred_element_type=jnp.float32)
                     + jnp.dot(lo, rep, preferred_element_type=jnp.float32))

        # One compare/select + direct store per output-row offset di
        # (each output lane receives exactly one contribution).
        for di in range(kh):
            tgt = tgt_ref[di]                                  # (1, W_out) f32
            vals = jnp.where(off_exp == tgt, x_exp, 0.0)
            o_ref[:, di * W_out:(di + 1) * W_out] = vals.astype(o_ref.dtype)

    return kernel


# ---------------------------------------------------------------------------
# block sizing / compiler params (generation-aware)
# ---------------------------------------------------------------------------
def _row_block_and_vmem(rows, bytes_in_per_row, bytes_out_per_row):
    try:
        vmem_cap = int(pltpu.get_tpu_info().vmem_capacity_bytes)
    except Exception:
        vmem_cap = 128 * 1024 * 1024
    two_core = vmem_cap <= (64 * 1024 * 1024)          # v7x-class parts
    target_out = (6 << 20) if two_core else (12 << 20)  # output bytes per step

    per_row = bytes_in_per_row + bytes_out_per_row
    # 2x pipeline buffers of (in + out) must fit well inside scoped VMEM.
    r_budget = max(32, (vmem_cap // 3) // (2 * per_row))
    R = min(max(1, target_out // max(1, bytes_out_per_row)), r_budget)
    if two_core and rows >= 4 * 32:
        # >= 2 pipelined steps per TensorCore on megacore parts.
        R = min(R, max(32, rows // 4))
    # Round to a multiple of 32 (int8 sublane packing, satisfies (8,128) rule).
    R = max(32, (R // 32) * 32)
    if R >= rows:
        R = rows                                       # full-dims block: legal
    step_bytes = R * per_row
    vmem_limit = int(max(32 << 20,
                         min(4 * step_bytes + (8 << 20), (vmem_cap * 3) // 4)))
    return R, vmem_limit


# ---------------------------------------------------------------------------
# host-side precompute
# ---------------------------------------------------------------------------
def compute_window_offsets(indices, kernel_size, output_hw):
    """PyTorch-style flat plane indices -> compact int8 window-offset ids in
    [0, kh*kw).  Out-of-window indices map to -1 and are silently dropped
    (-> zeros); PyTorch MaxUnpool2d would raise instead."""
    kh, kw = kernel_size
    _, W_out = output_hw
    _, _, Hp, Wp = indices.shape
    assert kh * kw <= 127, "pooling window too large for int8 offset ids"
    idx = indices.astype(jnp.int32)
    i = jnp.arange(Hp, dtype=jnp.int32)[None, None, :, None]
    j = jnp.arange(Wp, dtype=jnp.int32)[None, None, None, :]
    base = (i * kh) * W_out + j * kw
    delta = idx - base
    di = delta // W_out
    dj = delta - di * W_out
    valid = (di >= 0) & (di < kh) & (dj >= 0) & (dj < kw)
    return jnp.where(valid, di * kw + dj, -1).astype(jnp.int8)


def _placement_constants(kh, kw, Wp, W_out):
    """Constant lane-repeat matrix and per-di comparison targets."""
    j = jnp.arange(Wp, dtype=jnp.int32)[:, None]
    l = jnp.arange(W_out, dtype=jnp.int32)[None, :]
    rep = (l // kw == j).astype(jnp.bfloat16)                    # (Wp, W_out)
    di = jnp.arange(kh, dtype=jnp.int32)[:, None, None]
    tgt = (di * kw + (l % kw)[None, :, :]).astype(jnp.float32)   # (kh,1,W_out)
    return rep, tgt


# ---------------------------------------------------------------------------
# wrappers
# ---------------------------------------------------------------------------
def _unpool_from_offsets(x, off, rep, tgt, output_size, kernel_size):
    kh, kw = kernel_size
    N, C, Hp, Wp = x.shape
    _, _, H_out, W_out = output_size
    assert output_size[0] == N and output_size[1] == C
    assert H_out == Hp * kh and W_out == Wp * kw, (
        "only non-overlapping unpool (stride == kernel_size, padding == 0)")
    assert H_out * W_out < 2 ** 31

    rows = N * C * Hp
    lanes_out = kh * W_out
    x_bytes = jnp.dtype(x.dtype).itemsize

    # Free 2-D views (contiguous reshapes, no data movement).
    x2 = x.reshape(rows, Wp)
    off2 = off.reshape(rows, Wp)

    bytes_in_per_row = Wp * x_bytes + Wp                 # values + int8 offsets
    bytes_out_per_row = lanes_out * x_bytes
    R, vmem_limit = _row_block_and_vmem(rows, bytes_in_per_row,
                                        bytes_out_per_row)
    grid = pl.cdiv(rows, R)

    n_mm = 2 if x.dtype == jnp.bfloat16 else 4           # off + value piece(s)
    cost = pl.CostEstimate(
        flops=2 * rows * Wp * W_out * n_mm,
        transcendentals=0,
        bytes_accessed=(rows * (bytes_in_per_row + bytes_out_per_row)
                        + rep.size * 2 + tgt.size * 4))

    out2 = pl.pallas_call(
        _make_unpool_kernel(kh, W_out),
        out_shape=jax.ShapeDtypeStruct((rows, lanes_out), x.dtype),
        grid_spec=pltpu.PrefetchScalarGridSpec(
            num_scalar_prefetch=0,
            grid=(grid,),
            in_specs=[
                pl.BlockSpec((R, Wp), lambda n: (n, 0)),            # x
                pl.BlockSpec((R, Wp), lambda n: (n, 0)),            # off (int8)
                pl.BlockSpec((Wp, W_out), lambda n: (0, 0)),        # rep const
                pl.BlockSpec((kh, 1, W_out), lambda n: (0, 0, 0)),  # tgt const
            ],
            out_specs=pl.BlockSpec((R, lanes_out), lambda n: (n, 0)),
        ),
        compiler_params=pltpu.CompilerParams(
            dimension_semantics=("parallel",),
            vmem_limit_bytes=vmem_limit),
        cost_estimate=cost,
    )(x2, off2, rep, tgt)

    # Memory-identical view of the NCHW result -> free reshape.
    return out2.reshape(N, C, H_out, W_out)


class StatefulMaxUnpool2dPallas:
    """Mirror of the PyTorch StatefulMaxUnpool2d: the stateful pooling object
    contributes (kernel_size, indices, input_size); forward(x) is
    nn.MaxUnpool2d(kernel_size)(x, indices, input_size).

    Everything that depends only on the (fixed) indices is precomputed once:
    compact int8 window-offset ids and the constant placement matrices."""

    def __init__(self, kernel_size, indices, input_size):
        self.kernel_size = tuple(kernel_size)
        self.indices = indices
        self.input_size = tuple(input_size)
        kh, kw = self.kernel_size
        _, _, H_out, W_out = self.input_size
        _, _, _, Wp = indices.shape
        self._off = compute_window_offsets(indices, self.kernel_size,
                                           (H_out, W_out))
        self._rep, self._tgt = _placement_constants(kh, kw, Wp, W_out)

    def __call__(self, x):
        return _unpool_from_offsets(x, self._off, self._rep, self._tgt,
                                    self.input_size, self.kernel_size)


def max_unpool2d_pallas(x, indices, output_size, kernel_size):
    """Functional path (recomputes offset ids each call).
    # TODO(synk): fuse compute_window_offsets into the kernel (pass raw
    # indices, do the delta/di/dj math on the VPU) to avoid materializing an
    # input-sized offset array in HBM on every call."""
    kh, kw = kernel_size
    _, _, H_out, W_out = output_size
    _, _, _, Wp = x.shape
    off = compute_window_offsets(indices, kernel_size, (H_out, W_out))
    rep, tgt = _placement_constants(kh, kw, Wp, W_out)
    return _unpool_from_offsets(x, off, rep, tgt, output_size, kernel_size)


# ---- deterministic "stateful pooling" simulation (plain JAX glue) ----------
def maxpool2d_with_indices(inp, kh, kw):
    """MaxPool2d(kernel=stride=(kh,kw), padding=0) returning values + flat
    indices (PyTorch convention: index into the H*W plane per (n, c))."""
    N, C, H, W = inp.shape
    Hp, Wp = H // kh, W // kw
    xw = (inp.reshape(N, C, Hp, kh, Wp, kw)
             .transpose(0, 1, 2, 4, 3, 5)
             .reshape(N, C, Hp, Wp, kh * kw))
    pooled = xw.max(axis=-1)
    arg = jnp.argmax(xw, axis=-1)
    wi = arg // kw
    wj = arg % kw
    i_grid = jnp.arange(Hp)[None, None, :, None]
    j_grid = jnp.arange(Wp)[None, None, None, :]
    flat_idx = (i_grid * kh + wi) * W + (j_grid * kw + wj)
    return pooled, flat_idx.astype(jnp.int32)


def unpool_reference(x, indices, output_size):
    N, C, H, W = output_size
    NC = N * C
    xf = x.reshape(NC, -1)
    idf = indices.reshape(NC, -1)
    out = jnp.zeros((NC, H * W), x.dtype)
    out = out.at[jnp.arange(NC)[:, None], idf].set(xf)
    return out.reshape(N, C, H, W)


if __name__ == "__main__":
    N, C, H, W = 2, 4, 16, 16
    kh, kw = 2, 2

    key = jax.random.PRNGKey(0)
    inp = jax.random.normal(key, (N, C, H, W), dtype=jnp.float32)

    # Simulate the stateful pooling pass (produces x, indices, input_size).
    x_pooled, indices = maxpool2d_with_indices(inp, kh, kw)
    input_size = (N, C, H, W)

    unpool = StatefulMaxUnpool2dPallas((kh, kw), indices, input_size)

    # f32 path (bit-exact 3-way bf16 split on the MXU).
    out = jax.block_until_ready(unpool(x_pooled))
    ref = unpool_reference(x_pooled, indices, input_size)
    assert out.shape == (N, C, H, W) and out.dtype == x_pooled.dtype
    assert jnp.allclose(out, ref, rtol=1e-6, atol=0.0), "f32 unpool mismatch"

    # bf16 path (single native-rate MXU pass).
    x_bf = x_pooled.astype(jnp.bfloat16)
    out_bf = jax.block_until_ready(unpool(x_bf))
    ref_bf = unpool_reference(x_bf, indices, input_size)
    assert jnp.allclose(out_bf.astype(jnp.float32), ref_bf.astype(jnp.float32),
                        rtol=1e-6, atol=0.0), "bf16 unpool mismatch"

    print("KERNEL_OK")
</pallas_src>

<mosaic_0001>
module attributes {stable_mosaic.version = 11 : i64} {
  func.func @kernel(%arg0: i32, %arg1: memref<64x8xf32, #tpu.memory_space<vmem>>, %arg2: memref<64x8xi8, #tpu.memory_space<vmem>>, %arg3: memref<8x16xbf16, #tpu.memory_space<vmem>>, %arg4: memref<2x1x16xf32, #tpu.memory_space<vmem>>, %arg5: memref<64x32xf32, #tpu.memory_space<vmem>>) attributes {dimension_semantics = [#tpu.dimension_semantics<parallel>], iteration_bounds = array<i64: 1>, scalar_prefetch = 0 : i64, scratch_operands = 0 : i64, tpu.core_type = #tpu.core_type<tc>, window_params = [{transform_indices = @transform_0, window_bounds = array<i64: 64, 8>}, {transform_indices = @transform_1, window_bounds = array<i64: 64, 8>}, {pipeline_mode = #tpu.pipeline_mode<synchronous>, transform_indices = @transform_2, window_bounds = array<i64: 8, 16>}, {pipeline_mode = #tpu.pipeline_mode<synchronous>, transform_indices = @transform_3, window_bounds = array<i64: 2, 1, 16>}, {transform_indices = @transform_4, window_bounds = array<i64: 64, 32>}]} {
    %c0 = arith.constant 0 : index
    %c0_0 = arith.constant 0 : index
    %0 = vector.load %arg3[%c0, %c0_0] : memref<8x16xbf16, #tpu.memory_space<vmem>>, vector<8x16xbf16>
    %c0_1 = arith.constant 0 : index
    %c0_2 = arith.constant 0 : index
    %1 = vector.load %arg2[%c0_1, %c0_2] : memref<64x8xi8, #tpu.memory_space<vmem>>, vector<64x8xi8>
    %2 = arith.extsi %1 : vector<64x8xi8> to vector<64x8xi32>
    %3 = arith.sitofp %2 : vector<64x8xi32> to vector<64x8xf32>
    %4 = arith.truncf %3 : vector<64x8xf32> to vector<64x8xbf16>
    %cst = arith.constant dense<0.000000e+00> : vector<64x16xf32>
    %5 = tpu.matmul %4, %0, %cst {dimension_numbers = #tpu.dot_dimension_numbers<[1], [0], [0], [1], [0, 0, 1, 1], [], []>} : vector<64x8xbf16>, vector<8x16xbf16>, vector<64x16xf32> -> vector<64x16xf32>
    %c0_3 = arith.constant 0 : index
    %c0_4 = arith.constant 0 : index
    %6 = vector.load %arg1[%c0_3, %c0_4] : memref<64x8xf32, #tpu.memory_space<vmem>>, vector<64x8xf32>
    %7 = arith.truncf %6 : vector<64x8xf32> to vector<64x8xbf16>
    %8 = arith.extf %7 : vector<64x8xbf16> to vector<64x8xf32>
    %9 = arith.subf %6, %8 : vector<64x8xf32>
    %10 = arith.truncf %9 : vector<64x8xf32> to vector<64x8xbf16>
    %11 = arith.extf %10 : vector<64x8xbf16> to vector<64x8xf32>
    %12 = arith.subf %9, %11 : vector<64x8xf32>
    %13 = arith.truncf %12 : vector<64x8xf32> to vector<64x8xbf16>
    %cst_5 = arith.constant dense<0.000000e+00> : vector<64x16xf32>
    %14 = tpu.matmul %7, %0, %cst_5 {dimension_numbers = #tpu.dot_dimension_numbers<[1], [0], [0], [1], [0, 0, 1, 1], [], []>} : vector<64x8xbf16>, vector<8x16xbf16>, vector<64x16xf32> -> vector<64x16xf32>
    %cst_6 = arith.constant dense<0.000000e+00> : vector<64x16xf32>
    %15 = tpu.matmul %10, %0, %cst_6 {dimension_numbers = #tpu.dot_dimension_numbers<[1], [0], [0], [1], [0, 0, 1, 1], [], []>} : vector<64x8xbf16>, vector<8x16xbf16>, vector<64x16xf32> -> vector<64x16xf32>
    %16 = arith.addf %14, %15 : vector<64x16xf32>
    %cst_7 = arith.constant dense<0.000000e+00> : vector<64x16xf32>
    %17 = tpu.matmul %13, %0, %cst_7 {dimension_numbers = #tpu.dot_dimension_numbers<[1], [0], [0], [1], [0, 0, 1, 1], [], []>} : vector<64x8xbf16>, vector<8x16xbf16>, vector<64x16xf32> -> vector<64x16xf32>
    %18 = arith.addf %16, %17 : vector<64x16xf32>
    %c0_8 = arith.constant 0 : index
    %c0_9 = arith.constant 0 : index
    %c0_10 = arith.constant 0 : index
    %19 = vector.load %arg4[%c0_8, %c0_9, %c0_10] : memref<2x1x16xf32, #tpu.memory_space<vmem>>, vector<1x1x16xf32>
    %20 = vector.shape_cast %19 : vector<1x1x16xf32> to vector<1x16xf32>
    %21 = vector.broadcast %20 : vector<1x16xf32> to vector<64x16xf32>
    %22 = arith.cmpf oeq, %5, %21 : vector<64x16xf32>
    %cst_11 = arith.constant 0.000000e+00 : f32
    %23 = vector.broadcast %cst_11 : f32 to vector<64x16xf32>
    %24 = arith.select %22, %18, %23 : vector<64x16xi1>, vector<64x16xf32>
    %c0_12 = arith.constant 0 : index
    %c0_13 = arith.constant 0 : index
    %25 = vector.load %arg5[%c0_12, %c0_13] : memref<64x32xf32, #tpu.memory_space<vmem>>, vector<64x16xf32>
    tpu.vector_store %arg5[%c0_12, %c0_13], %24 {strides = array<i32>} : memref<64x32xf32, #tpu.memory_space<vmem>>, vector<64x16xf32>,
    %c1 = arith.constant 1 : index
    %c0_14 = arith.constant 0 : index
    %c0_15 = arith.constant 0 : index
    %26 = vector.load %arg4[%c1, %c0_14, %c0_15] : memref<2x1x16xf32, #tpu.memory_space<vmem>>, vector<1x1x16xf32>
    %27 = vector.shape_cast %26 : vector<1x1x16xf32> to vector<1x16xf32>
    %28 = vector.broadcast %27 : vector<1x16xf32> to vector<64x16xf32>
    %29 = arith.cmpf oeq, %5, %28 : vector<64x16xf32>
    %cst_16 = arith.constant 0.000000e+00 : f32
    %30 = vector.broadcast %cst_16 : f32 to vector<64x16xf32>
    %31 = arith.select %29, %18, %30 : vector<64x16xi1>, vector<64x16xf32>
    %c0_17 = arith.constant 0 : index
    %c16 = arith.constant 16 : index
    %32 = vector.load %arg5[%c0_17, %c16] : memref<64x32xf32, #tpu.memory_space<vmem>>, vector<64x16xf32>
    tpu.vector_store %arg5[%c0_17, %c16], %31 {strides = array<i32>} : memref<64x32xf32, #tpu.memory_space<vmem>>, vector<64x16xf32>,
    return
  }
  func.func @transform_0(%arg0: i32) -> (i32, i32) {
    %c0_i32 = arith.constant 0 : i32
    %c0_i32_0 = arith.constant 0 : i32
    return %arg0, %c0_i32 : i32, i32
  }
  func.func @transform_1(%arg0: i32) -> (i32, i32) {
    %c0_i32 = arith.constant 0 : i32
    %c0_i32_0 = arith.constant 0 : i32
    return %arg0, %c0_i32 : i32, i32
  }
  func.func @transform_2(%arg0: i32) -> (i32, i32) {
    %c0_i32 = arith.constant 0 : i32
    %c0_i32_0 = arith.constant 0 : i32
    %c0_i32_1 = arith.constant 0 : i32
    return %c0_i32, %c0_i32_0 : i32, i32
  }
  func.func @transform_3(%arg0: i32) -> (i32, i32, i32) {
    %c0_i32 = arith.constant 0 : i32
    %c0_i32_0 = arith.constant 0 : i32
    %c0_i32_1 = arith.constant 0 : i32
    %c0_i32_2 = arith.constant 0 : i32
    return %c0_i32, %c0_i32_0, %c0_i32_1 : i32, i32, i32
  }
  func.func @transform_4(%arg0: i32) -> (i32, i32) {
    %c0_i32 = arith.constant 0 : i32
    %c0_i32_0 = arith.constant 0 : i32
    return %arg0, %c0_i32 : i32, i32
  }
}

</mosaic_0001>

<llo_original>
// kernel: tpu_custom_call.1
$region0: #{tpu_custom_call.1}
  #allocation0 [shape = 'u32[]', space=smem, size = 0x4, offset = 0x4, fixed_abs, tag = 'smem constant byte address 0x4 - core index']
  #allocation1 [shape = 'u32[144,128]{1,0:T(1,128)}', space=vmem, size = 0x12000, scoped, tag = 'internal scratch']
  %s0 = inlined_call_operand.vmem [shape: f32[64,8], index: 0, kind: input, shape index: {}]
  %s1 = inlined_call_operand.vmem [shape: s8[64,8], index: 1, kind: input, shape index: {}]
  %s2 = inlined_call_operand.vmem [shape: bf16[8,16], index: 2, kind: input, shape index: {}]
  %s3 = inlined_call_operand.vmem [shape: f32[2,1,16], index: 3, kind: input, shape index: {}]
  %s4 = inlined_call_operand.vmem [shape: f32[64,32], index: 4, kind: output, shape index: {}]
  %s5 = sld [smem:[#allocation0]]
  $region26: #{tpu_custom_call.1} parent=0
    _
  %s7 = ssub.s32 1, %s5
  %s8 = scalar_select 0, %s7, %s5
  // Predicated region
  $region2: #{tpu_custom_call.1} parent=0 // pred_check
    _
  $region3: #{tpu_custom_call.1} parent=0 // pred_check_branch
    %10 = sbr.rel (0) target = $region5
  $region4: #{tpu_custom_call.1} parent=0 // pred_region
    _
  $region5: #{tpu_custom_call.1} parent=0 // pred_fallthru
    _
  // Predicated region
  $region6: #{tpu_custom_call.1} parent=0 // pred_check
    _
  $region7: #{tpu_custom_call.1} parent=0 // pred_check_branch
    %12 = sbr.rel (0) target = $region9
  $region8: #{tpu_custom_call.1} parent=0 // pred_region
    _
  $region9: #{tpu_custom_call.1} parent=0 // pred_fallthru
    _
  // Predicated region
  $region10: #{tpu_custom_call.1} parent=0 // pred_check
    _
  $region11: #{tpu_custom_call.1} parent=0 // pred_check_branch
    %14 = sbr.rel (0) target = $region13
  $region12: #{tpu_custom_call.1} parent=0 // pred_region
    _
  $region13: #{tpu_custom_call.1} parent=0 // pred_fallthru
    _
  // Predicated region
  $region14: #{tpu_custom_call.1} parent=0 // pred_check
    _
  $region15: #{tpu_custom_call.1} parent=0 // pred_check_branch
    %16 = sbr.rel (0) target = $region17
  $region16: #{tpu_custom_call.1} parent=0 // pred_region
    _
  $region17: #{tpu_custom_call.1} parent=0 // pred_fallthru
    _
  %v18 = vld [vmem:[%s2] sm:$0xf]
  %v19 = vld [vmem:[%s1] sm:$0x3]
  %v20 = vld [vmem:[%s1 + $0x2] sm:$0x3]
  %v21 = vld [vmem:[%s1 + $0x4] sm:$0x3]
  %v22 = vld [vmem:[%s1 + $0x6] sm:$0x3]
  %v23 = vld [vmem:[%s1 + $0x8] sm:$0x3]
  %v24 = vld [vmem:[%s1 + $0xa] sm:$0x3]
  %v25 = vld [vmem:[%s1 + $0xc] sm:$0x3]
  %v26 = vld [vmem:[%s1 + $0xe] sm:$0x3]
  %v27 = vunpack.c.l.s8.bf16 %v19
  %v28 = vunpack.c.l.s8.bf16 %v20
  %v29 = vunpack.c.l.s8.bf16 %v21
  %v30 = vunpack.c.l.s8.bf16 %v22
  %v31 = vunpack.c.l.s8.bf16 %v23
  %v32 = vunpack.c.l.s8.bf16 %v24
  %v33 = vunpack.c.l.s8.bf16 %v25
  %v34 = vunpack.c.l.s8.bf16 %v26
  %v43 = vunpack.c.l.b16 %v27
  %v44 = vunpack.c.l.b16 %v28
  %v45 = vunpack.c.l.b16 %v29
  %v46 = vunpack.c.l.b16 %v30
  %v47 = vunpack.c.l.b16 %v31
  %v48 = vunpack.c.l.b16 %v32
  %v49 = vunpack.c.l.b16 %v33
  %v50 = vunpack.c.l.b16 %v34
  %v51 = vpack.c.b16 %v44, %v43
  %v52 = vpack.c.b16 %v46, %v45
  %v53 = vpack.c.b16 %v48, %v47
  %v54 = vpack.c.b16 %v50, %v49
  %vm55 = vcmask 64512
  %v57 = vsel %vm55, %v51, 0
  %v60 = vsel %vm55, %v52, 0
  %v63 = vsel %vm55, %v53, 0
  %v66 = vsel %vm55, %v54, 0
  %vm68 = vcmask 1043456
  %v70 = vsel %vm68, %v18, 0
  %72 = vmatprep.subr.bf16.mxu0 0
  %73 = vmatpush1.bf16.msra.mxu0 %v70
  %74 = vmatprep.subr.bf16.mxu0 0
  %75 = vmatpush1.bf16.msra.mxu0 0
  %76 = vmatprep.subr.bf16.mxu0 0
  %77 = vmatpush1.bf16.msra.mxu0 0
  %78 = vmatprep.subr.bf16.mxu0 0
  %79 = vmatpush1.bf16.msra.mxu0 0
  %80 = vmatprep.subr.bf16.mxu0 0
  %81 = vmatpush1.bf16.msra.mxu0 0
  %82 = vmatprep.subr.bf16.mxu0 0
  %83 = vmatpush1.bf16.msra.mxu0 0
  %84 = vmatprep.subr.bf16.mxu0 0
  %85 = vmatpush1.bf16.msra.mxu0 0
  %86 = vmatprep.subr.bf16.mxu0 0
  %87 = vmatpush1.bf16.msra.mxu0 0
  %88 = vmatprep.subr.bf16.mxu0 0
  %89 = vmatpush1.bf16.msra.mxu0 0
  %90 = vmatprep.subr.bf16.mxu0 0
  %91 = vmatpush1.bf16.msra.mxu0 0
  %92 = vmatprep.subr.bf16.mxu0 0
  %93 = vmatpush1.bf16.msra.mxu0 0
  %94 = vmatprep.subr.bf16.mxu0 0
  %95 = vmatpush1.bf16.msra.mxu0 0
  %96 = vmatprep.subr.bf16.mxu0 0
  %97 = vmatpush1.bf16.msra.mxu0 0
  %98 = vmatprep.subr.bf16.mxu0 0
  %99 = vmatpush1.bf16.msra.mxu0 0
  %100 = vmatprep.subr.bf16.mxu0 0
  %101 = vmatpush1.bf16.msra.mxu0 0
  %102 = vmatprep.subr.bf16.mxu0 0
  %103 = vmatpush1.bf16.msra.mxu0 0
  %104 = vmatprep.mubr.bf16.mxu0 0
  %105 = vmatmul.mubr.bf16.gmra.mrb[0].mxu0 %v57
  %v106 = vpop.f32.mrb[0].mxu0
  %v107 = vadd.f32 0.0, %v106
  %v108 = vpop.f32.mrb[0].mxu0
  %v109 = vpop.f32.mrb[0].mxu0
  %v110 = vadd.f32 0.0, %v109
  %v111 = vpop.f32.mrb[0].mxu0
  %112 = vmatprep.mubr.bf16.mxu0 0
  %113 = vmatmul.mubr.bf16.gmra.mrb[0].mxu0 %v60
  %v114 = vpop.f32.mrb[0].mxu0
  %v115 = vadd.f32 0.0, %v114
  %v116 = vpop.f32.mrb[0].mxu0
  %v117 = vpop.f32.mrb[0].mxu0
  %v118 = vadd.f32 0.0, %v117
  %v119 = vpop.f32.mrb[0].mxu0
  %120 = vmatprep.mubr.bf16.mxu0 0
  %121 = vmatmul.mubr.bf16.gmra.mrb[0].mxu0 %v63
  %v122 = vpop.f32.mrb[0].mxu0
  %v123 = vadd.f32 0.0, %v122
  %v124 = vpop.f32.mrb[0].mxu0
  %v125 = vpop.f32.mrb[0].mxu0
  %v126 = vadd.f32 0.0, %v125
  %v127 = vpop.f32.mrb[0].mxu0
  %128 = vmatprep.mubr.bf16.mxu0 0
  %129 = vmatmul.mubr.bf16.gmra.mrb[0].mxu0 %v66
  %v130 = vpop.f32.mrb[0].mxu0
  %v131 = vadd.f32 0.0, %v130
  %v132 = vpop.f32.mrb[0].mxu0
  %v133 = vpop.f32.mrb[0].mxu0
  %v134 = vadd.f32 0.0, %v133
  %v135 = vpop.f32.mrb[0].mxu0
  %136 = vdwg.mxu0
  %v137 = vld [vmem:[%s0] sm:$0xff]
  %v138 = vld [vmem:[%s0 + $0x8] sm:$0xff]
  %v139 = vld [vmem:[%s0 + $0x10] sm:$0xff]
  %v140 = vld [vmem:[%s0 + $0x18] sm:$0xff]
  %v141 = vld [vmem:[%s0 + $0x20] sm:$0xff]
  %v142 = vld [vmem:[%s0 + $0x28] sm:$0xff]
  %v143 = vld [vmem:[%s0 + $0x30] sm:$0xff]
  %v144 = vld [vmem:[%s0 + $0x38] sm:$0xff]
  %v145 = vpack.c.bf16 %v138, %v137
  %v146 = vpack.c.bf16 %v140, %v139
  %v147 = vpack.c.bf16 %v142, %v141
  %v148 = vpack.c.bf16 %v144, %v143
  %v149 = vunpack.c.l.bf16 %v145
  %v150 = vunpack.c.h.bf16 %v145
  %v151 = vunpack.c.l.bf16 %v146
  %v152 = vunpack.c.h.bf16 %v146
  %v153 = vunpack.c.l.bf16 %v147
  %v154 = vunpack.c.h.bf16 %v147
  %v155 = vunpack.c.l.bf16 %v148
  %v156 = vunpack.c.h.bf16 %v148
  %v157 = vsub.f32 %v137, %v149
  %v158 = vsub.f32 %v138, %v150
  %v159 = vsub.f32 %v139, %v151
  %v160 = vsub.f32 %v140, %v152
  %v161 = vsub.f32 %v141, %v153
  %v162 = vsub.f32 %v142, %v154
  %v163 = vsub.f32 %v143, %v155
  %v164 = vsub.f32 %v144, %v156
  %v165 = vpack.c.bf16 %v158, %v157
  %v166 = vpack.c.bf16 %v160, %v159
  %v167 = vpack.c.bf16 %v162, %v161
  %v168 = vpack.c.bf16 %v164, %v163
  %v169 = vunpack.c.l.bf16 %v165
  %v170 = vunpack.c.h.bf16 %v165
  %v171 = vunpack.c.l.bf16 %v166
  %v172 = vunpack.c.h.bf16 %v166
  %v173 = vunpack.c.l.bf16 %v167
  %v174 = vunpack.c.h.bf16 %v167
  %v175 = vunpack.c.l.bf16 %v168
  %v176 = vunpack.c.h.bf16 %v168
  %v177 = vsub.f32 %v157, %v169
  %v178 = vsub.f32 %v158, %v170
  %v179 = vsub.f32 %v159, %v171
  %v180 = vsub.f32 %v160, %v172
  %v181 = vsub.f32 %v161, %v173
  %v182 = vsub.f32 %v162, %v174
  %v183 = vsub.f32 %v163, %v175
  %v184 = vsub.f32 %v164, %v176
  %v185 = vpack.c.bf16 %v178, %v177
  %v186 = vpack.c.bf16 %v180, %v179
  %v187 = vpack.c.bf16 %v182, %v181
  %v188 = vpack.c.bf16 %v184, %v183
  %v190 = vsel %vm55, %v165, 0
  %v193 = vsel %vm55, %v166, 0
  %v196 = vsel %vm55, %v167, 0
  %v199 = vsel %vm55, %v168, 0
  %201 = vmatprep.subr.bf16.mxu0 0
  %202 = vmatpush1.bf16.msra.mxu0 %v70
  %203 = vmatprep.subr.bf16.mxu0 0
  %204 = vmatpush1.bf16.msra.mxu0 0
  %205 = vmatprep.subr.bf16.mxu0 0
  %206 = vmatpush1.bf16.msra.mxu0 0
  %207 = vmatprep.subr.bf16.mxu0 0
  %208 = vmatpush1.bf16.msra.mxu0 0
  %209 = vmatprep.subr.bf16.mxu0 0
  %210 = vmatpush1.bf16.msra.mxu0 0
  %211 = vmatprep.subr.bf16.mxu0 0
  %212 = vmatpush1.bf16.msra.mxu0 0
  %213 = vmatprep.subr.bf16.mxu0 0
  %214 = vmatpush1.bf16.msra.mxu0 0
  %215 = vmatprep.subr.bf16.mxu0 0
  %216 = vmatpush1.bf16.msra.mxu0 0
  %217 = vmatprep.subr.bf16.mxu0 0
  %218 = vmatpush1.bf16.msra.mxu0 0
  %219 = vmatprep.subr.bf16.mxu0 0
  %220 = vmatpush1.bf16.msra.mxu0 0
  %221 = vmatprep.subr.bf16.mxu0 0
  %222 = vmatpush1.bf16.msra.mxu0 0
  %223 = vmatprep.subr.bf16.mxu0 0
  %224 = vmatpush1.bf16.msra.mxu0 0
  %225 = vmatprep.subr.bf16.mxu0 0
  %226 = vmatpush1.bf16.msra.mxu0 0
  %227 = vmatprep.subr.bf16.mxu0 0
  %228 = vmatpush1.bf16.msra.mxu0 0
  %229 = vmatprep.subr.bf16.mxu0 0
  %230 = vmatpush1.bf16.msra.mxu0 0
  %231 = vmatprep.subr.bf16.mxu0 0
  %232 = vmatpush1.bf16.msra.mxu0 0
  %233 = vmatprep.mubr.bf16.mxu0 0
  %234 = vmatmul.mubr.bf16.gmra.mrb[0].mxu0 %v190
  %v235 = vpop.f32.mrb[0].mxu0
  %v236 = vadd.f32 0.0, %v235
  %v237 = vpop.f32.mrb[0].mxu0
  %v238 = vpop.f32.mrb[0].mxu0
  %v239 = vadd.f32 0.0, %v238
  %v240 = vpop.f32.mrb[0].mxu0
  %241 = vmatprep.mubr.bf16.mxu0 0
  %242 = vmatmul.mubr.bf16.gmra.mrb[0].mxu0 %v193
  %v243 = vpop.f32.mrb[0].mxu0
  %v244 = vadd.f32 0.0, %v243
  %v245 = vpop.f32.mrb[0].mxu0
  %v246 = vpop.f32.mrb[0].mxu0
  %v247 = vadd.f32 0.0, %v246
  %v248 = vpop.f32.mrb[0].mxu0
  %249 = vmatprep.mubr.bf16.mxu0 0
  %250 = vmatmul.mubr.bf16.gmra.mrb[0].mxu0 %v196
  %v251 = vpop.f32.mrb[0].mxu0
  %v252 = vadd.f32 0.0, %v251
  %v253 = vpop.f32.mrb[0].mxu0
  %v254 = vpop.f32.mrb[0].mxu0
  %v255 = vadd.f32 0.0, %v254
  %v256 = vpop.f32.mrb[0].mxu0
  %257 = vmatprep.mubr.bf16.mxu0 0
  %258 = vmatmul.mubr.bf16.gmra.mrb[0].mxu0 %v199
  %v259 = vpop.f32.mrb[0].mxu0
  %v260 = vadd.f32 0.0, %v259
  %v261 = vpop.f32.mrb[0].mxu0
  %v262 = vpop.f32.mrb[0].mxu0
  %v263 = vadd.f32 0.0, %v262
  %v264 = vpop.f32.mrb[0].mxu0
  %265 = vdwg.mxu0
  %v267 = vsel %vm55, %v145, 0
  %v270 = vsel %vm55, %v146, 0
  %v273 = vsel %vm55, %v147, 0
  %v276 = vsel %vm55, %v148, 0
  %278 = vmatprep.subr.bf16.mxu0 0
  %279 = vmatpush1.bf16.msra.mxu0 %v70
  %280 = vmatprep.subr.bf16.mxu0 0
  %281 = vmatpush1.bf16.msra.mxu0 0
  %282 = vmatprep.subr.bf16.mxu0 0
  %283 = vmatpush1.bf16.msra.mxu0 0
  %284 = vmatprep.subr.bf16.mxu0 0
  %285 = vmatpush1.bf16.msra.mxu0 0
  %286 = vmatprep.subr.bf16.mxu0 0
  %287 = vmatpush1.bf16.msra.mxu0 0
  %288 = vmatprep.subr.bf16.mxu0 0
  %289 = vmatpush1.bf16.msra.mxu0 0
  %290 = vmatprep.subr.bf16.mxu0 0
  %291 = vmatpush1.bf16.msra.mxu0 0
  %292 = vmatprep.subr.bf16.mxu0 0
  %293 = vmatpush1.bf16.msra.mxu0 0
  %294 = vmatprep.subr.bf16.mxu0 0
  %295 = vmatpush1.bf16.msra.mxu0 0
  %296 = vmatprep.subr.bf16.mxu0 0
  %297 = vmatpush1.bf16.msra.mxu0 0
  %298 = vmatprep.subr.bf16.mxu0 0
  %299 = vmatpush1.bf16.msra.mxu0 0
  %300 = vmatprep.subr.bf16.mxu0 0
  %301 = vmatpush1.bf16.msra.mxu0 0
  %302 = vmatprep.subr.bf16.mxu0 0
  %303 = vmatpush1.bf16.msra.mxu0 0
  %304 = vmatprep.subr.bf16.mxu0 0
  %305 = vmatpush1.bf16.msra.mxu0 0
  %306 = vmatprep.subr.bf16.mxu0 0
  %307 = vmatpush1.bf16.msra.mxu0 0
  %308 = vmatprep.subr.bf16.mxu0 0
  %309 = vmatpush1.bf16.msra.mxu0 0
  %310 = vmatprep.mubr.bf16.mxu0 0
  %311 = vmatmul.mubr.bf16.gmra.mrb[0].mxu0 %v267
  %v312 = vpop.f32.mrb[0].mxu0
  %v313 = vadd.f32 %v236, %v312
  %v314 = vpop.f32.mrb[0].mxu0
  %v315 = vpop.f32.mrb[0].mxu0
  %v316 = vadd.f32 %v239, %v315
  %v317 = vpop.f32.mrb[0].mxu0
  %318 = vmatprep.mubr.bf16.mxu0 0
  %319 = vmatmul.mubr.bf16.gmra.mrb[0].mxu0 %v270
  %v320 = vpop.f32.mrb[0].mxu0
  %v321 = vadd.f32 %v244, %v320
  %v322 = vpop.f32.mrb[0].mxu0
  %v323 = vpop.f32.mrb[0].mxu0
  %v324 = vadd.f32 %v247, %v323
  %v325 = vpop.f32.mrb[0].mxu0
  %326 = vmatprep.mubr.bf16.mxu0 0
  %327 = vmatmul.mubr.bf16.gmra.mrb[0].mxu0 %v273
  %v328 = vpop.f32.mrb[0].mxu0
  %v329 = vadd.f32 %v252, %v328
  %v330 = vpop.f32.mrb[0].mxu0
  %v331 = vpop.f32.mrb[0].mxu0
  %v332 = vadd.f32 %v255, %v331
  %v333 = vpop.f32.mrb[0].mxu0
  %334 = vmatprep.mubr.bf16.mxu0 0
  %335 = vmatmul.mubr.bf16.gmra.mrb[0].mxu0 %v276
  %v336 = vpop.f32.mrb[0].mxu0
  %v337 = vadd.f32 %v260, %v336
  %v338 = vpop.f32.mrb[0].mxu0
  %v339 = vpop.f32.mrb[0].mxu0
  %v340 = vadd.f32 %v263, %v339
  %v341 = vpop.f32.mrb[0].mxu0
  %342 = vdwg.mxu0
  %v344 = vsel %vm55, %v185, 0
  %v347 = vsel %vm55, %v186, 0
  %v350 = vsel %vm55, %v187, 0
  %v353 = vsel %vm55, %v188, 0
  %355 = vmatprep.subr.bf16.mxu0 0
  %356 = vmatpush1.bf16.msra.mxu0 %v70
  %357 = vmatprep.subr.bf16.mxu0 0
  %358 = vmatpush1.bf16.msra.mxu0 0
  %359 = vmatprep.subr.bf16.mxu0 0
  %360 = vmatpush1.bf16.msra.mxu0 0
  %361 = vmatprep.subr.bf16.mxu0 0
  %362 = vmatpush1.bf16.msra.mxu0 0
  %363 = vmatprep.subr.bf16.mxu0 0
  %364 = vmatpush1.bf16.msra.mxu0 0
  %365 = vmatprep.subr.bf16.mxu0 0
  %366 = vmatpush1.bf16.msra.mxu0 0
  %367 = vmatprep.subr.bf16.mxu0 0
  %368 = vmatpush1.bf16.msra.mxu0 0
  %369 = vmatprep.subr.bf16.mxu0 0
  %370 = vmatpush1.bf16.msra.mxu0 0
  %371 = vmatprep.subr.bf16.mxu0 0
  %372 = vmatpush1.bf16.msra.mxu0 0
  %373 = vmatprep.subr.bf16.mxu0 0
  %374 = vmatpush1.bf16.msra.mxu0 0
  %375 = vmatprep.subr.bf16.mxu0 0
  %376 = vmatpush1.bf16.msra.mxu0 0
  %377 = vmatprep.subr.bf16.mxu0 0
  %378 = vmatpush1.bf16.msra.mxu0 0
  %379 = vmatprep.subr.bf16.mxu0 0
  %380 = vmatpush1.bf16.msra.mxu0 0
  %381 = vmatprep.subr.bf16.mxu0 0
  %382 = vmatpush1.bf16.msra.mxu0 0
  %383 = vmatprep.subr.bf16.mxu0 0
  %384 = vmatpush1.bf16.msra.mxu0 0
  %385 = vmatprep.subr.bf16.mxu0 0
  %386 = vmatpush1.bf16.msra.mxu0 0
  %387 = vmatprep.mubr.bf16.mxu0 0
  %388 = vmatmul.mubr.bf16.gmra.mrb[0].mxu0 %v344
  %v389 = vpop.f32.mrb[0].mxu0
  %v390 = vadd.f32 0.0, %v389
  %v391 = vpop.f32.mrb[0].mxu0
  %v392 = vpop.f32.mrb[0].mxu0
  %v393 = vadd.f32 0.0, %v392
  %v394 = vpop.f32.mrb[0].mxu0
  %395 = vmatprep.mubr.bf16.mxu0 0
  %396 = vmatmul.mubr.bf16.gmra.mrb[0].mxu0 %v347
  %v397 = vpop.f32.mrb[0].mxu0
  %v398 = vadd.f32 0.0, %v397
  %v399 = vpop.f32.mrb[0].mxu0
  %v400 = vpop.f32.mrb[0].mxu0
  %v401 = vadd.f32 0.0, %v400
  %v402 = vpop.f32.mrb[0].mxu0
  %403 = vmatprep.mubr.bf16.mxu0 0
  %404 = vmatmul.mubr.bf16.gmra.mrb[0].mxu0 %v350
  %v405 = vpop.f32.mrb[0].mxu0
  %v406 = vadd.f32 0.0, %v405
  %v407 = vpop.f32.mrb[0].mxu0
  %v408 = vpop.f32.mrb[0].mxu0
  %v409 = vadd.f32 0.0, %v408
  %v410 = vpop.f32.mrb[0].mxu0
  %411 = vmatprep.mubr.bf16.mxu0 0
  %412 = vmatmul.mubr.bf16.gmra.mrb[0].mxu0 %v353
  %v413 = vpop.f32.mrb[0].mxu0
  %v414 = vadd.f32 0.0, %v413
  %v415 = vpop.f32.mrb[0].mxu0
  %v416 = vpop.f32.mrb[0].mxu0
  %v417 = vadd.f32 0.0, %v416
  %v418 = vpop.f32.mrb[0].mxu0
  %419 = vdwg.mxu0
  %v420 = vadd.f32 %v313, %v390
  %v421 = vadd.f32 %v316, %v393
  %v422 = vadd.f32 %v321, %v398
  %v423 = vadd.f32 %v324, %v401
  %v424 = vadd.f32 %v329, %v406
  %v425 = vadd.f32 %v332, %v409
  %v426 = vadd.f32 %v337, %v414
  %v427 = vadd.f32 %v340, %v417
  %v428 = vld [vmem:[%s3] sm:$0x1]
  %v430 = vlaneseq
  %v431 = vshrl.u32 %v430, 7
  %v432 = vsub.s32 0, %v431
  %v433 = vrot.slane %v428, %v432
  %vm435 = vcmp.eq.f32.partialorder %v107, %v433
  %vm436 = vcmp.eq.f32.partialorder %v110, %v433
  %vm437 = vcmp.eq.f32.partialorder %v115, %v433
  %vm438 = vcmp.eq.f32.partialorder %v118, %v433
  %vm439 = vcmp.eq.f32.partialorder %v123, %v433
  %vm440 = vcmp.eq.f32.partialorder %v126, %v433
  %vm441 = vcmp.eq.f32.partialorder %v131, %v433
  %vm442 = vcmp.eq.f32.partialorder %v134, %v433
  %v443 = vsel %vm435, %v420, 0.0
  %v444 = vsel %vm436, %v421, 0.0
  %v445 = vsel %vm437, %v422, 0.0
  %v446 = vsel %vm438, %v423, 0.0
  %v447 = vsel %vm439, %v424, 0.0
  %v448 = vsel %vm440, %v425, 0.0
  %v449 = vsel %vm441, %v426, 0.0
  %v450 = vsel %vm442, %v427, 0.0
  %vm451 = vcmask 130048
  %452 = vst.msk [vmem:[%s4] sm:$0xff] %vm451, %v443
  %453 = vst.msk [vmem:[%s4 + $0x8] sm:$0xff] %vm451, %v444
  %454 = vst.msk [vmem:[%s4 + $0x10] sm:$0xff] %vm451, %v445
  %455 = vst.msk [vmem:[%s4 + $0x18] sm:$0xff] %vm451, %v446
  %456 = vst.msk [vmem:[%s4 + $0x20] sm:$0xff] %vm451, %v447
  %457 = vst.msk [vmem:[%s4 + $0x28] sm:$0xff] %vm451, %v448
  %458 = vst.msk [vmem:[%s4 + $0x30] sm:$0xff] %vm451, %v449
  %459 = vst.msk [vmem:[%s4 + $0x38] sm:$0xff] %vm451, %v450
  %s460 = scalar_lea.vmem %s3, 1
  %v461 = vld [vmem:[%s460] sm:$0x1]
  %v463 = vlaneseq
  %v464 = vshrl.u32 %v463, 7
  %v465 = vsub.s32 0, %v464
  %v466 = vrot.slane %v461, %v465
  %vm468 = vcmp.eq.f32.partialorder %v107, %v466
  %vm469 = vcmp.eq.f32.partialorder %v110, %v466
  %vm470 = vcmp.eq.f32.partialorder %v115, %v466
  %vm471 = vcmp.eq.f32.partialorder %v118, %v466
  %vm472 = vcmp.eq.f32.partialorder %v123, %v466
  %vm473 = vcmp.eq.f32.partialorder %v126, %v466
  %vm474 = vcmp.eq.f32.partialorder %v131, %v466
  %vm475 = vcmp.eq.f32.partialorder %v134, %v466
  %v476 = vsel %vm468, %v420, 0.0
  %v477 = vsel %vm469, %v421, 0.0
  %v478 = vsel %vm470, %v422, 0.0
  %v479 = vsel %vm471, %v423, 0.0
  %v480 = vsel %vm472, %v424, 0.0
  %v481 = vsel %vm473, %v425, 0.0
  %v482 = vsel %vm474, %v426, 0.0
  %v483 = vsel %vm475, %v427, 0.0
  %492 = vrot.lane.b32.xlu0 %v476, 16
  %v493 = vpop.permute.xlu0 %492
  %494 = vrot.lane.b32.xlu0 %v477, 16
  %v495 = vpop.permute.xlu0 %494
  %496 = vrot.lane.b32.xlu0 %v478, 16
  %v497 = vpop.permute.xlu0 %496
  %498 = vrot.lane.b32.xlu0 %v479, 16
  %v499 = vpop.permute.xlu0 %498
  %500 = vrot.lane.b32.xlu0 %v480, 16
  %v501 = vpop.permute.xlu0 %500
  %502 = vrot.lane.b32.xlu0 %v481, 16
  %v503 = vpop.permute.xlu0 %502
  %504 = vrot.lane.b32.xlu0 %v482, 16
  %v505 = vpop.permute.xlu0 %504
  %506 = vrot.lane.b32.xlu0 %v483, 16
  %v507 = vpop.permute.xlu0 %506
  %vm516 = vcmask 261248
  %517 = vst.msk [vmem:[%s4] sm:$0xff] %vm516, %v493
  %518 = vst.msk [vmem:[%s4 + $0x8] sm:$0xff] %vm516, %v495
  %519 = vst.msk [vmem:[%s4 + $0x10] sm:$0xff] %vm516, %v497
  %520 = vst.msk [vmem:[%s4 + $0x18] sm:$0xff] %vm516, %v499
  %521 = vst.msk [vmem:[%s4 + $0x20] sm:$0xff] %vm516, %v501
  %522 = vst.msk [vmem:[%s4 + $0x28] sm:$0xff] %vm516, %v503
  %523 = vst.msk [vmem:[%s4 + $0x30] sm:$0xff] %vm516, %v505
  %524 = vst.msk [vmem:[%s4 + $0x38] sm:$0xff] %vm516, %v507
  // Predicated region
  $region18: #{tpu_custom_call.1} parent=0 // pred_check
    _
  $region19: #{tpu_custom_call.1} parent=0 // pred_check_branch
    %526 = sbr.rel (0) target = $region21
  $region20: #{tpu_custom_call.1} parent=0 // pred_region
    _
  $region21: #{tpu_custom_call.1} parent=0 // pred_fallthru
    _
  // Predicated region
  $region22: #{tpu_custom_call.1} parent=0 // pred_check
    _
  $region23: #{tpu_custom_call.1} parent=0 // pred_check_branch
    %528 = sbr.rel (0) target = $region25
  $region24: #{tpu_custom_call.1} parent=0 // pred_region
    _
  $region25: #{tpu_custom_call.1} parent=0 // pred_fallthru
    _

</llo_original>
